<compile_context>
chip_gen: v7x
topology: tpu7x:2x2x1
jax: 0.10.0
libtpu: 0.0.40
codegen_flags: <defaults>
</compile_context>

<pallas_src>
import functools

import jax
import jax.numpy as jnp
from jax.experimental import pallas as pl
from jax.experimental.pallas import tpu as pltpu


# ----------------------------------------------------------------------------
# helpers
# ----------------------------------------------------------------------------
def _round_up(x, m):
    return ((x + m - 1) // m) * m


def _pad2d(a, rows, cols):
    return jnp.pad(a, ((0, rows - a.shape[0]), (0, cols - a.shape[1])))


# ----------------------------------------------------------------------------
# Fused MLP kernel: one batch tile per grid step; all 4 layers in one body.
# Weights/x are bf16 (MXU inputs), biases/accumulation are f32.
# ----------------------------------------------------------------------------
def _fnn_kernel(x_ref, w1_ref, b1_ref, w2_ref, b2_ref,
                w3_ref, b3_ref, w4_ref, b4_ref, o_ref):
    h = jnp.dot(x_ref[...], w1_ref[...], preferred_element_type=jnp.float32)
    h = jnp.maximum(h + b1_ref[...], 0.0)
    h = jnp.dot(h.astype(jnp.bfloat16), w2_ref[...],
                preferred_element_type=jnp.float32)
    h = jnp.maximum(h + b2_ref[...], 0.0)
    h = jnp.dot(h.astype(jnp.bfloat16), w3_ref[...],
                preferred_element_type=jnp.float32)
    h = jnp.maximum(h + b3_ref[...], 0.0)
    o = jnp.dot(h.astype(jnp.bfloat16), w4_ref[...],
                preferred_element_type=jnp.float32) + b4_ref[...]
    o_ref[...] = o.astype(o_ref.dtype)


# ----------------------------------------------------------------------------
# One-time param preparation: lane-dense zero padding + bf16 cast (weights).
# Zero padding is math-preserving because padded bias entries are 0 and
# ReLU(0) = 0, so padded hidden lanes stay exactly 0 through every layer.
# ----------------------------------------------------------------------------
def prepare_params(params):
    w1, b1 = params["w1"], params["b1"]   # (784, 196), (196,)
    w2, b2 = params["w2"], params["b2"]   # (196,  49), ( 49,)
    w3, b3 = params["w3"], params["b3"]   # ( 49,  49), ( 49,)
    w4, b4 = params["w4"], params["b4"]   # ( 49,  10), ( 10,)
    D = w1.shape[0]
    P1 = _round_up(w1.shape[1], 128)      # 196 -> 256
    P2 = _round_up(w2.shape[1], 128)      #  49 -> 128
    P3 = _round_up(w3.shape[1], 128)      #  49 -> 128
    P4 = _round_up(w4.shape[1], 128)      #  10 -> 128
    prepped = dict(
        w1=_pad2d(w1, D, P1).astype(jnp.bfloat16),
        w2=_pad2d(w2, P1, P2).astype(jnp.bfloat16),
        w3=_pad2d(w3, P2, P3).astype(jnp.bfloat16),
        w4=_pad2d(w4, P3, P4).astype(jnp.bfloat16),
        b1=_pad2d(b1.reshape(1, -1), 1, P1),   # biases stay f32
        b2=_pad2d(b2.reshape(1, -1), 1, P2),
        b3=_pad2d(b3.reshape(1, -1), 1, P3),
        b4=_pad2d(b4.reshape(1, -1), 1, P4),
    )
    out_dim = w4.shape[1]
    return prepped, out_dim


@functools.partial(jax.jit, static_argnames=("out_dim", "batch_tile"))
def fnn_forward(x, prepped, *, out_dim=10, batch_tile=1024):
    """x: (N, 784) float32.  prepped: output of prepare_params.
    Returns (N, out_dim) float32 logits."""
    N, D = x.shape
    w1, b1 = prepped["w1"], prepped["b1"]
    w2, b2 = prepped["w2"], prepped["b2"]
    w3, b3 = prepped["w3"], prepped["b3"]
    w4, b4 = prepped["w4"], prepped["b4"]
    P1, P2, P3, P4 = w1.shape[1], w2.shape[1], w3.shape[1], w4.shape[1]

    # Batch tile: as large as batch_tile, but keep >= ~4 grid steps so the
    # "parallel" batch axis can be split across v7x's 2 TensorCores; always a
    # multiple of 8 (sublane).  No wrapper-side pad of x: the ragged final
    # block is handled by Pallas (masked store; garbage tail rows never land).
    tb = max(8, min(batch_tile, _round_up(pl.cdiv(N, 4), 8)))
    grid = (pl.cdiv(N, tb),)

    # bf16 cast of x at the pallas_call boundary halves the dominant HBM
    # stream and feeds the MXU at its bf16 rate (accumulation stays f32).
    xb = x.astype(jnp.bfloat16)

    flops = 2 * N * (D * P1 + P1 * P2 + P2 * P3 + P3 * P4)
    bytes_accessed = (
        N * D * 2 + N * P4 * 4
        + (D * P1 + P1 * P2 + P2 * P3 + P3 * P4) * 2
        + (P1 + P2 + P3 + P4) * 4
    )

    out = pl.pallas_call(
        _fnn_kernel,
        out_shape=jax.ShapeDtypeStruct((N, P4), jnp.float32),
        grid=grid,
        in_specs=[
            pl.BlockSpec((tb, D), lambda i: (i, 0)),     # x tile (bf16, full-D)
            pl.BlockSpec((D, P1), lambda i: (0, 0)),     # w1 (bf16)
            pl.BlockSpec((1, P1), lambda i: (0, 0)),     # b1 (f32)
            pl.BlockSpec((P1, P2), lambda i: (0, 0)),    # w2
            pl.BlockSpec((1, P2), lambda i: (0, 0)),     # b2
            pl.BlockSpec((P2, P3), lambda i: (0, 0)),    # w3
            pl.BlockSpec((1, P3), lambda i: (0, 0)),     # b3
            pl.BlockSpec((P3, P4), lambda i: (0, 0)),    # w4
            pl.BlockSpec((1, P4), lambda i: (0, 0)),     # b4
        ],
        out_specs=pl.BlockSpec((tb, P4), lambda i: (i, 0)),
        compiler_params=pltpu.CompilerParams(
            dimension_semantics=("parallel",)),
        cost_estimate=pl.CostEstimate(
            flops=flops, transcendentals=0, bytes_accessed=bytes_accessed),
    )(xb, w1, b1, w2, b2, w3, b3, w4, b4)

    return out[:, :out_dim]


# ----------------------------------------------------------------------------
# Params (PyTorch FNN: fc1 784->196, fc2 196->49, fc3 49->49, fc4 49->10).
# Stored as (in, out); forward is y = x @ W + b.
# ----------------------------------------------------------------------------
def init_params(key):
    ks = jax.random.split(key, 8)
    s = 0.05
    return dict(
        w1=jax.random.normal(ks[0], (28 * 28, 14 * 14), jnp.float32) * s,
        b1=jax.random.normal(ks[1], (14 * 14,), jnp.float32) * s,
        w2=jax.random.normal(ks[2], (14 * 14, 7 * 7), jnp.float32) * s,
        b2=jax.random.normal(ks[3], (7 * 7,), jnp.float32) * s,
        w3=jax.random.normal(ks[4], (7 * 7, 7 * 7), jnp.float32) * s,
        b3=jax.random.normal(ks[5], (7 * 7,), jnp.float32) * s,
        w4=jax.random.normal(ks[6], (7 * 7, 10), jnp.float32) * s,
        b4=jax.random.normal(ks[7], (10,), jnp.float32) * s,
    )


# Pure-JAX f32 reference (same math as the PyTorch module's forward).
def _reference_forward(x, p):
    h = jax.nn.relu(x @ p["w1"] + p["b1"])
    h = jax.nn.relu(h @ p["w2"] + p["b2"])
    h = jax.nn.relu(h @ p["w3"] + p["b3"])
    return h @ p["w4"] + p["b4"]


if __name__ == "__main__":
    key = jax.random.PRNGKey(0)
    k_x, k_p = jax.random.split(key)
    # fc1 expects 28*28 = 784 input features.
    x = jax.random.normal(k_x, (2, 28 * 28), jnp.float32)
    params = init_params(k_p)
    prepped, out_dim = prepare_params(params)

    out = fnn_forward(x, prepped, out_dim=out_dim)
    out = jax.block_until_ready(out)
    assert out.shape == (2, 10), out.shape

    # bf16 MXU inputs with f32 accumulation: tolerance relaxed vs f32 path.
    ref = _reference_forward(x, params)
    assert jnp.allclose(out, ref, rtol=2e-2, atol=2e-2), \
        float(jnp.max(jnp.abs(out - ref)))

    print("KERNEL_OK")
</pallas_src>

<mosaic_0001>
module attributes {stable_mosaic.version = 11 : i64} {
  func.func @_fnn_kernel(%arg0: i32, %arg1: memref<8x784xbf16, #tpu.memory_space<vmem>>, %arg2: memref<784x256xbf16, #tpu.memory_space<vmem>>, %arg3: memref<1x256xf32, #tpu.memory_space<vmem>>, %arg4: memref<256x128xbf16, #tpu.memory_space<vmem>>, %arg5: memref<1x128xf32, #tpu.memory_space<vmem>>, %arg6: memref<128x128xbf16, #tpu.memory_space<vmem>>, %arg7: memref<1x128xf32, #tpu.memory_space<vmem>>, %arg8: memref<128x128xbf16, #tpu.memory_space<vmem>>, %arg9: memref<1x128xf32, #tpu.memory_space<vmem>>, %arg10: memref<8x128xf32, #tpu.memory_space<vmem>>) attributes {dimension_semantics = [#tpu.dimension_semantics<parallel>], iteration_bounds = array<i64: 1>, scalar_prefetch = 0 : i64, scratch_operands = 0 : i64, tpu.core_type = #tpu.core_type<tc>, window_params = [{transform_indices = @transform_0, window_bounds = array<i64: 8, 784>}, {pipeline_mode = #tpu.pipeline_mode<synchronous>, transform_indices = @transform_1, window_bounds = array<i64: 784, 256>}, {pipeline_mode = #tpu.pipeline_mode<synchronous>, transform_indices = @transform_2, window_bounds = array<i64: 1, 256>}, {pipeline_mode = #tpu.pipeline_mode<synchronous>, transform_indices = @transform_3, window_bounds = array<i64: 256, 128>}, {pipeline_mode = #tpu.pipeline_mode<synchronous>, transform_indices = @transform_4, window_bounds = array<i64: 1, 128>}, {pipeline_mode = #tpu.pipeline_mode<synchronous>, transform_indices = @transform_5, window_bounds = array<i64: 128, 128>}, {pipeline_mode = #tpu.pipeline_mode<synchronous>, transform_indices = @transform_6, window_bounds = array<i64: 1, 128>}, {pipeline_mode = #tpu.pipeline_mode<synchronous>, transform_indices = @transform_7, window_bounds = array<i64: 128, 128>}, {pipeline_mode = #tpu.pipeline_mode<synchronous>, transform_indices = @transform_8, window_bounds = array<i64: 1, 128>}, {transform_indices = @transform_9, window_bounds = array<i64: 8, 128>}]} {
    %c0 = arith.constant 0 : index
    %c0_0 = arith.constant 0 : index
    %0 = vector.load %arg1[%c0, %c0_0] : memref<8x784xbf16, #tpu.memory_space<vmem>>, vector<8x784xbf16>
    %c0_1 = arith.constant 0 : index
    %c0_2 = arith.constant 0 : index
    %1 = vector.load %arg2[%c0_1, %c0_2] : memref<784x256xbf16, #tpu.memory_space<vmem>>, vector<784x256xbf16>
    %cst = arith.constant dense<0.000000e+00> : vector<8x256xf32>
    %2 = tpu.matmul %0, %1, %cst {dimension_numbers = #tpu.dot_dimension_numbers<[1], [0], [0], [1], [0, 0, 1, 1], [], []>} : vector<8x784xbf16>, vector<784x256xbf16>, vector<8x256xf32> -> vector<8x256xf32>
    %c0_3 = arith.constant 0 : index
    %c0_4 = arith.constant 0 : index
    %3 = vector.load %arg3[%c0_3, %c0_4] : memref<1x256xf32, #tpu.memory_space<vmem>>, vector<1x256xf32>
    %4 = vector.broadcast %3 : vector<1x256xf32> to vector<8x256xf32>
    %5 = arith.addf %2, %4 : vector<8x256xf32>
    %cst_5 = arith.constant 0.000000e+00 : f32
    %6 = vector.broadcast %cst_5 : f32 to vector<8x256xf32>
    %7 = arith.maximumf %5, %6 : vector<8x256xf32>
    %8 = arith.truncf %7 : vector<8x256xf32> to vector<8x256xbf16>
    %c0_6 = arith.constant 0 : index
    %c0_7 = arith.constant 0 : index
    %9 = vector.load %arg4[%c0_6, %c0_7] : memref<256x128xbf16, #tpu.memory_space<vmem>>, vector<256x128xbf16>
    %cst_8 = arith.constant dense<0.000000e+00> : vector<8x128xf32>
    %10 = tpu.matmul %8, %9, %cst_8 {dimension_numbers = #tpu.dot_dimension_numbers<[1], [0], [0], [1], [0, 0, 1, 1], [], []>} : vector<8x256xbf16>, vector<256x128xbf16>, vector<8x128xf32> -> vector<8x128xf32>
    %c0_9 = arith.constant 0 : index
    %c0_10 = arith.constant 0 : index
    %11 = vector.load %arg5[%c0_9, %c0_10] : memref<1x128xf32, #tpu.memory_space<vmem>>, vector<1x128xf32>
    %12 = vector.broadcast %11 : vector<1x128xf32> to vector<8x128xf32>
    %13 = arith.addf %10, %12 : vector<8x128xf32>
    %cst_11 = arith.constant 0.000000e+00 : f32
    %14 = vector.broadcast %cst_11 : f32 to vector<8x128xf32>
    %15 = arith.maximumf %13, %14 : vector<8x128xf32>
    %16 = arith.truncf %15 : vector<8x128xf32> to vector<8x128xbf16>
    %c0_12 = arith.constant 0 : index
    %c0_13 = arith.constant 0 : index
    %17 = vector.load %arg6[%c0_12, %c0_13] : memref<128x128xbf16, #tpu.memory_space<vmem>>, vector<128x128xbf16>
    %cst_14 = arith.constant dense<0.000000e+00> : vector<8x128xf32>
    %18 = tpu.matmul %16, %17, %cst_14 {dimension_numbers = #tpu.dot_dimension_numbers<[1], [0], [0], [1], [0, 0, 1, 1], [], []>} : vector<8x128xbf16>, vector<128x128xbf16>, vector<8x128xf32> -> vector<8x128xf32>
    %c0_15 = arith.constant 0 : index
    %c0_16 = arith.constant 0 : index
    %19 = vector.load %arg7[%c0_15, %c0_16] : memref<1x128xf32, #tpu.memory_space<vmem>>, vector<1x128xf32>
    %20 = vector.broadcast %19 : vector<1x128xf32> to vector<8x128xf32>
    %21 = arith.addf %18, %20 : vector<8x128xf32>
    %cst_17 = arith.constant 0.000000e+00 : f32
    %22 = vector.broadcast %cst_17 : f32 to vector<8x128xf32>
    %23 = arith.maximumf %21, %22 : vector<8x128xf32>
    %24 = arith.truncf %23 : vector<8x128xf32> to vector<8x128xbf16>
    %c0_18 = arith.constant 0 : index
    %c0_19 = arith.constant 0 : index
    %25 = vector.load %arg8[%c0_18, %c0_19] : memref<128x128xbf16, #tpu.memory_space<vmem>>, vector<128x128xbf16>
    %cst_20 = arith.constant dense<0.000000e+00> : vector<8x128xf32>
    %26 = tpu.matmul %24, %25, %cst_20 {dimension_numbers = #tpu.dot_dimension_numbers<[1], [0], [0], [1], [0, 0, 1, 1], [], []>} : vector<8x128xbf16>, vector<128x128xbf16>, vector<8x128xf32> -> vector<8x128xf32>
    %c0_21 = arith.constant 0 : index
    %c0_22 = arith.constant 0 : index
    %27 = vector.load %arg9[%c0_21, %c0_22] : memref<1x128xf32, #tpu.memory_space<vmem>>, vector<1x128xf32>
    %28 = vector.broadcast %27 : vector<1x128xf32> to vector<8x128xf32>
    %29 = arith.addf %26, %28 : vector<8x128xf32>
    %c0_23 = arith.constant 0 : index
    %c0_24 = arith.constant 0 : index
    %30 = vector.load %arg10[%c0_23, %c0_24] : memref<8x128xf32, #tpu.memory_space<vmem>>, vector<8x128xf32>
    tpu.vector_store %arg10[%c0_23, %c0_24], %29 {strides = array<i32>} : memref<8x128xf32, #tpu.memory_space<vmem>>, vector<8x128xf32>,
    return
  }
  func.func @transform_0(%arg0: i32) -> (i32, i32) {
    %c0_i32 = arith.constant 0 : i32
    %c0_i32_0 = arith.constant 0 : i32
    return %arg0, %c0_i32 : i32, i32
  }
  func.func @transform_1(%arg0: i32) -> (i32, i32) {
    %c0_i32 = arith.constant 0 : i32
    %c0_i32_0 = arith.constant 0 : i32
    %c0_i32_1 = arith.constant 0 : i32
    return %c0_i32, %c0_i32_0 : i32, i32
  }
  func.func @transform_2(%arg0: i32) -> (i32, i32) {
    %c0_i32 = arith.constant 0 : i32
    %c0_i32_0 = arith.constant 0 : i32
    %c0_i32_1 = arith.constant 0 : i32
    return %c0_i32, %c0_i32_0 : i32, i32
  }
  func.func @transform_3(%arg0: i32) -> (i32, i32) {
    %c0_i32 = arith.constant 0 : i32
    %c0_i32_0 = arith.constant 0 : i32
    %c0_i32_1 = arith.constant 0 : i32
    return %c0_i32, %c0_i32_0 : i32, i32
  }
  func.func @transform_4(%arg0: i32) -> (i32, i32) {
    %c0_i32 = arith.constant 0 : i32
    %c0_i32_0 = arith.constant 0 : i32
    %c0_i32_1 = arith.constant 0 : i32
    return %c0_i32, %c0_i32_0 : i32, i32
  }
  func.func @transform_5(%arg0: i32) -> (i32, i32) {
    %c0_i32 = arith.constant 0 : i32
    %c0_i32_0 = arith.constant 0 : i32
    %c0_i32_1 = arith.constant 0 : i32
    return %c0_i32, %c0_i32_0 : i32, i32
  }
  func.func @transform_6(%arg0: i32) -> (i32, i32) {
    %c0_i32 = arith.constant 0 : i32
    %c0_i32_0 = arith.constant 0 : i32
    %c0_i32_1 = arith.constant 0 : i32
    return %c0_i32, %c0_i32_0 : i32, i32
  }
  func.func @transform_7(%arg0: i32) -> (i32, i32) {
    %c0_i32 = arith.constant 0 : i32
    %c0_i32_0 = arith.constant 0 : i32
    %c0_i32_1 = arith.constant 0 : i32
    return %c0_i32, %c0_i32_0 : i32, i32
  }
  func.func @transform_8(%arg0: i32) -> (i32, i32) {
    %c0_i32 = arith.constant 0 : i32
    %c0_i32_0 = arith.constant 0 : i32
    %c0_i32_1 = arith.constant 0 : i32
    return %c0_i32, %c0_i32_0 : i32, i32
  }
  func.func @transform_9(%arg0: i32) -> (i32, i32) {
    %c0_i32 = arith.constant 0 : i32
    %c0_i32_0 = arith.constant 0 : i32
    return %arg0, %c0_i32 : i32, i32
  }
}

</mosaic_0001>

<llo_original>
// kernel: fnn_forward.1
$region0: #{fnn_forward.1}
  #allocation0 [shape = 'u32[]', space=smem, size = 0x4, offset = 0x4, fixed_abs, tag = 'smem constant byte address 0x4 - core index']
  #allocation1 [shape = 'u32[144,128]{1,0:T(1,128)}', space=vmem, size = 0x12000, scoped, tag = 'internal scratch']
  %s0 = inlined_call_operand.vmem [shape: bf16[2,784], index: 0, kind: input, shape index: {}]
  %s1 = inlined_call_operand.hbm [shape: bf16[784,256], index: 1, kind: input, shape index: {}]
  %s2 = inlined_call_operand.vmem [shape: f32[1,256], index: 2, kind: input, shape index: {}]
  %s3 = inlined_call_operand.hbm [shape: bf16[256,128], index: 3, kind: input, shape index: {}]
  %s4 = inlined_call_operand.vmem [shape: f32[1,128], index: 4, kind: input, shape index: {}]
  %s5 = inlined_call_operand.hbm [shape: bf16[128,128], index: 5, kind: input, shape index: {}]
  %s6 = inlined_call_operand.vmem [shape: f32[1,128], index: 6, kind: input, shape index: {}]
  %s7 = inlined_call_operand.hbm [shape: bf16[128,128], index: 7, kind: input, shape index: {}]
  %s8 = inlined_call_operand.vmem [shape: f32[1,128], index: 8, kind: input, shape index: {}]
  %s9 = inlined_call_operand.hbm [shape: f32[2,128], index: 9, kind: output, shape index: {}]
  %s10 = sld [smem:[#allocation0]]
  $region62: #{fnn_forward.1} parent=0
    _
  %s12 = ssub.s32 1, %s10
  %s13 = scalar_select 0, %s12, %s10
  $region1: #{fnn_forward.1} parent=0
    #allocation2 [shape = 'u8[401408]{0}', space=vmem, size = 0x62000, scoped, tag = 'input window, operand 1, single buffered']
    #allocation3 [shape = 's32[1]{0}', space=sflag, size = 0x4, scoped, tag = 'scoped memory for fnn_forward.1']
    #allocation4 [shape = 's32[1]{0}', space=sflag, size = 0x4, scoped, tag = 'scoped memory for fnn_forward.1']
    #allocation5 [shape = 'u8[65536]{0}', space=vmem, size = 0x10000, scoped, tag = 'input window, operand 3, single buffered']
    #allocation6 [shape = 's32[1]{0}', space=sflag, size = 0x4, scoped, tag = 'scoped memory for fnn_forward.1']
    #allocation7 [shape = 'u8[32768]{0}', space=vmem, size = 0x8000, scoped, tag = 'input window, operand 5, single buffered']
    #allocation8 [shape = 'u8[32768]{0}', space=vmem, size = 0x8000, scoped, tag = 'input window, operand 7, single buffered']
    #allocation9 [shape = 's32[1]{0}', space=sflag, size = 0x4, scoped, tag = 'scoped memory for fnn_forward.1']
    #allocation10 [shape = 'u8[4096]{0}', space=vmem, size = 0x1000, scoped, tag = 'output window, operand 0, single buffered']
    %14 = vsyncpa [#allocation3], 0
    %15 = vsyncpa [#allocation6], 0
    %16 = vsyncpa [#allocation9], 0
    %17 = vsyncpa [#allocation4], 0
    // Predicated region
    $region2: #{fnn_forward.1} parent=1 // pred_check
      _
    $region3: #{fnn_forward.1} parent=1 // pred_check_branch
      %19 = sbr.rel (0) target = $region5
    $region4: #{fnn_forward.1} parent=1 // pred_region
      _
    $region5: #{fnn_forward.1} parent=1 // pred_fallthru
      _
    // Predicated region
    $region6: #{fnn_forward.1} parent=1 // pred_check
      _
    $region7: #{fnn_forward.1} parent=1 // pred_check_branch
      %21 = sbr.rel (0) target = $region9
    $region8: #{fnn_forward.1} parent=1 // pred_region
      %s23 = ssub.s32 12544, 12544
      %24 = vsyncadd [#allocation3], %s23
      %s25 = sshll.u32 [#allocation2], 4
      %s26 = int_to_ptr.vmem [resolvable:$true] %s25
      %31 = dma.hbm_to_vmem [thread:$0]  %s1, 12544, %s26, [#allocation3], 128, 128, 8
    $region9: #{fnn_forward.1} parent=1 // pred_fallthru
      _
    // Predicated region
    $region10: #{fnn_forward.1} parent=1 // pred_check
      _
    $region11: #{fnn_forward.1} parent=1 // pred_check_branch
      %33 = sbr.rel (0) target = $region13
    $region12: #{fnn_forward.1} parent=1 // pred_region
      _
    $region13: #{fnn_forward.1} parent=1 // pred_fallthru
      _
    // Predicated region
    $region14: #{fnn_forward.1} parent=1 // pred_check
      _
    $region15: #{fnn_forward.1} parent=1 // pred_check_branch
      %35 = sbr.rel (0) target = $region17
    $region16: #{fnn_forward.1} parent=1 // pred_region
      %s37 = ssub.s32 2048, 2048
      %38 = vsyncadd [#allocation6], %s37
      %s39 = sshll.u32 [#allocation5], 4
      %s40 = int_to_ptr.vmem [resolvable:$true] %s39
      %45 = dma.hbm_to_vmem [thread:$0]  %s3, 2048, %s40, [#allocation6], 64, 64, 4
    $region17: #{fnn_forward.1} parent=1 // pred_fallthru
      _
    // Predicated region
    $region18: #{fnn_forward.1} parent=1 // pred_check
      _
    $region19: #{fnn_forward.1} parent=1 // pred_check_branch
      %47 = sbr.rel (0) target = $region21
    $region20: #{fnn_forward.1} parent=1 // pred_region
      _
    $region21: #{fnn_forward.1} parent=1 // pred_fallthru
      _
    // Predicated region
    $region22: #{fnn_forward.1} parent=1 // pred_check
      _
    $region23: #{fnn_forward.1} parent=1 // pred_check_branch
      %49 = sbr.rel (0) target = $region25
    $region24: #{fnn_forward.1} parent=1 // pred_region
      %s51 = ssub.s32 1024, 1024
      %52 = vsyncadd [#allocation6], %s51
      %s53 = sshll.u32 [#allocation7], 4
      %s54 = int_to_ptr.vmem [resolvable:$true] %s53
      %59 = dma.hbm_to_vmem [thread:$0]  %s5, 1024, %s54, [#allocation6], 64, 64, 4
    $region25: #{fnn_forward.1} parent=1 // pred_fallthru
      _
    // Predicated region
    $region26: #{fnn_forward.1} parent=1 // pred_check
      _
    $region27: #{fnn_forward.1} parent=1 // pred_check_branch
      %61 = sbr.rel (0) target = $region29
    $region28: #{fnn_forward.1} parent=1 // pred_region
      _
    $region29: #{fnn_forward.1} parent=1 // pred_fallthru
      _
    // Predicated region
    $region30: #{fnn_forward.1} parent=1 // pred_check
      _
    $region31: #{fnn_forward.1} parent=1 // pred_check_branch
      %63 = sbr.rel (0) target = $region33
    $region32: #{fnn_forward.1} parent=1 // pred_region
      %s65 = ssub.s32 1024, 1024
      %66 = vsyncadd [#allocation9], %s65
      %s67 = sshll.u32 [#allocation8], 4
      %s68 = int_to_ptr.vmem [resolvable:$true] %s67
      %73 = dma.hbm_to_vmem [thread:$0]  %s7, 1024, %s68, [#allocation9], 64, 64, 4
    $region33: #{fnn_forward.1} parent=1 // pred_fallthru
      _
    // Predicated region
    $region34: #{fnn_forward.1} parent=1 // pred_check
      _
    $region35: #{fnn_forward.1} parent=1 // pred_check_branch
      %75 = sbr.rel (0) target = $region37
    $region36: #{fnn_forward.1} parent=1 // pred_region
      _
    $region37: #{fnn_forward.1} parent=1 // pred_fallthru
      _
    // Predicated region
    $region38: #{fnn_forward.1} parent=1 // pred_check
      _
    $region39: #{fnn_forward.1} parent=1 // pred_check_branch
      %77 = sbr.rel (0) target = $region41
    $region40: #{fnn_forward.1} parent=1 // pred_region
      %78 = dma.done [#allocation3], 12544
    $region41: #{fnn_forward.1} parent=1 // pred_fallthru
      _
    // Predicated region
    $region42: #{fnn_forward.1} parent=1 // pred_check
      _
    $region43: #{fnn_forward.1} parent=1 // pred_check_branch
      %80 = sbr.rel (0) target = $region45
    $region44: #{fnn_forward.1} parent=1 // pred_region
      %81 = dma.done [#allocation6], 2048
    $region45: #{fnn_forward.1} parent=1 // pred_fallthru
      _
    // Predicated region
    $region46: #{fnn_forward.1} parent=1 // pred_check
      _
    $region47: #{fnn_forward.1} parent=1 // pred_check_branch
      %83 = sbr.rel (0) target = $region49
    $region48: #{fnn_forward.1} parent=1 // pred_region
      %84 = dma.done [#allocation6], 1024
    $region49: #{fnn_forward.1} parent=1 // pred_fallthru
      _
    // Predicated region
    $region50: #{fnn_forward.1} parent=1 // pred_check
      _
    $region51: #{fnn_forward.1} parent=1 // pred_check_branch
      %86 = sbr.rel (0) target = $region53
    $region52: #{fnn_forward.1} parent=1 // pred_region
      %87 = dma.done [#allocation9], 1024
    $region53: #{fnn_forward.1} parent=1 // pred_fallthru
      _
    %v89 = vld [vmem:[%s0] sm:$0x7f]
    %v90 = vld [vmem:[%s0 + $0x7] sm:$0x7f]
    %v91 = vld [vmem:[%s0 + $0xe] sm:$0x7f]
    %v92 = vld [vmem:[%s0 + $0x15] sm:$0x7f]
    %v93 = vld [vmem:[#allocation2] sm:$0xff]
    %v94 = vld [vmem:[#allocation2 + $0x8] sm:$0xff]
    %v95 = vld [vmem:[#allocation2 + $0x10] sm:$0xff]
    %v96 = vld [vmem:[#allocation2 + $0x18] sm:$0xff]
    %v97 = vld [vmem:[#allocation2 + $0x20] sm:$0xff]
    %v98 = vld [vmem:[#allocation2 + $0x28] sm:$0xff]
    %v99 = vld [vmem:[#allocation2 + $0x30] sm:$0xff]
    %v100 = vld [vmem:[#allocation2 + $0x38] sm:$0xff]
    %v101 = vld [vmem:[#allocation2 + $0x40] sm:$0xff]
    %v102 = vld [vmem:[#allocation2 + $0x48] sm:$0xff]
    %v103 = vld [vmem:[#allocation2 + $0x50] sm:$0xff]
    %v104 = vld [vmem:[#allocation2 + $0x58] sm:$0xff]
    %v105 = vld [vmem:[#allocation2 + $0x60] sm:$0xff]
    %v106 = vld [vmem:[#allocation2 + $0x68] sm:$0xff]
    %v107 = vld [vmem:[#allocation2 + $0x70] sm:$0xff]
    %v108 = vld [vmem:[#allocation2 + $0x78] sm:$0xff]
    %v109 = vld [vmem:[#allocation2 + $0x80] sm:$0xff]
    %v110 = vld [vmem:[#allocation2 + $0x88] sm:$0xff]
    %v111 = vld [vmem:[#allocation2 + $0x90] sm:$0xff]
    %v112 = vld [vmem:[#allocation2 + $0x98] sm:$0xff]
    %v113 = vld [vmem:[#allocation2 + $0xa0] sm:$0xff]
    %v114 = vld [vmem:[#allocation2 + $0xa8] sm:$0xff]
    %v115 = vld [vmem:[#allocation2 + $0xb0] sm:$0xff]
    %v116 = vld [vmem:[#allocation2 + $0xb8] sm:$0xff]
    %v117 = vld [vmem:[#allocation2 + $0xc0] sm:$0xff]
    %v118 = vld [vmem:[#allocation2 + $0xc8] sm:$0xff]
    %v119 = vld [vmem:[#allocation2 + $0xd0] sm:$0xff]
    %v120 = vld [vmem:[#allocation2 + $0xd8] sm:$0xff]
    %v121 = vld [vmem:[#allocation2 + $0xe0] sm:$0xff]
    %v122 = vld [vmem:[#allocation2 + $0xe8] sm:$0xff]
    %v123 = vld [vmem:[#allocation2 + $0xf0] sm:$0xff]
    %v124 = vld [vmem:[#allocation2 + $0xf8] sm:$0xff]
    %v125 = vld [vmem:[#allocation2 + $0x100] sm:$0xff]
    %v126 = vld [vmem:[#allocation2 + $0x108] sm:$0xff]
    %v127 = vld [vmem:[#allocation2 + $0x110] sm:$0xff]
    %v128 = vld [vmem:[#allocation2 + $0x118] sm:$0xff]
    %v129 = vld [vmem:[#allocation2 + $0x120] sm:$0xff]
    %v130 = vld [vmem:[#allocation2 + $0x128] sm:$0xff]
    %v131 = vld [vmem:[#allocation2 + $0x130] sm:$0xff]
    %v132 = vld [vmem:[#allocation2 + $0x138] sm:$0xff]
    %v133 = vld [vmem:[#allocation2 + $0x140] sm:$0xff]
    %v134 = vld [vmem:[#allocation2 + $0x148] sm:$0xff]
    %v135 = vld [vmem:[#allocation2 + $0x150] sm:$0xff]
    %v136 = vld [vmem:[#allocation2 + $0x158] sm:$0xff]
    %v137 = vld [vmem:[#allocation2 + $0x160] sm:$0xff]
    %v138 = vld [vmem:[#allocation2 + $0x168] sm:$0xff]
    %v139 = vld [vmem:[#allocation2 + $0x170] sm:$0xff]
    %v140 = vld [vmem:[#allocation2 + $0x178] sm:$0xff]
    %v141 = vld [vmem:[#allocation2 + $0x180] sm:$0xff]
    %v142 = vld [vmem:[#allocation2 + $0x188] sm:$0xff]
    %v143 = vld [vmem:[#allocation2 + $0x190] sm:$0xff]
    %v144 = vld [vmem:[#allocation2 + $0x198] sm:$0xff]
    %v145 = vld [vmem:[#allocation2 + $0x1a0] sm:$0xff]
    %v146 = vld [vmem:[#allocation2 + $0x1a8] sm:$0xff]
    %v147 = vld [vmem:[#allocation2 + $0x1b0] sm:$0xff]
    %v148 = vld [vmem:[#allocation2 + $0x1b8] sm:$0xff]
    %v149 = vld [vmem:[#allocation2 + $0x1c0] sm:$0xff]
    %v150 = vld [vmem:[#allocation2 + $0x1c8] sm:$0xff]
    %v151 = vld [vmem:[#allocation2 + $0x1d0] sm:$0xff]
    %v152 = vld [vmem:[#allocation2 + $0x1d8] sm:$0xff]
    %v153 = vld [vmem:[#allocation2 + $0x1e0] sm:$0xff]
    %v154 = vld [vmem:[#allocation2 + $0x1e8] sm:$0xff]
    %v155 = vld [vmem:[#allocation2 + $0x1f0] sm:$0xff]
    %v156 = vld [vmem:[#allocation2 + $0x1f8] sm:$0xff]
    %v157 = vld [vmem:[#allocation2 + $0x200] sm:$0xff]
    %v158 = vld [vmem:[#allocation2 + $0x208] sm:$0xff]
    %v159 = vld [vmem:[#allocation2 + $0x210] sm:$0xff]
    %v160 = vld [vmem:[#allocation2 + $0x218] sm:$0xff]
    %v161 = vld [vmem:[#allocation2 + $0x220] sm:$0xff]
    %v162 = vld [vmem:[#allocation2 + $0x228] sm:$0xff]
    %v163 = vld [vmem:[#allocation2 + $0x230] sm:$0xff]
    %v164 = vld [vmem:[#allocation2 + $0x238] sm:$0xff]
    %v165 = vld [vmem:[#allocation2 + $0x240] sm:$0xff]
    %v166 = vld [vmem:[#allocation2 + $0x248] sm:$0xff]
    %v167 = vld [vmem:[#allocation2 + $0x250] sm:$0xff]
    %v168 = vld [vmem:[#allocation2 + $0x258] sm:$0xff]
    %v169 = vld [vmem:[#allocation2 + $0x260] sm:$0xff]
    %v170 = vld [vmem:[#allocation2 + $0x268] sm:$0xff]
    %v171 = vld [vmem:[#allocation2 + $0x270] sm:$0xff]
    %v172 = vld [vmem:[#allocation2 + $0x278] sm:$0xff]
    %v173 = vld [vmem:[#allocation2 + $0x280] sm:$0xff]
    %v174 = vld [vmem:[#allocation2 + $0x288] sm:$0xff]
    %v175 = vld [vmem:[#allocation2 + $0x290] sm:$0xff]
    %v176 = vld [vmem:[#allocation2 + $0x298] sm:$0xff]
    %v177 = vld [vmem:[#allocation2 + $0x2a0] sm:$0xff]
    %v178 = vld [vmem:[#allocation2 + $0x2a8] sm:$0xff]
    %v179 = vld [vmem:[#allocation2 + $0x2b0] sm:$0xff]
    %v180 = vld [vmem:[#allocation2 + $0x2b8] sm:$0xff]
    %v181 = vld [vmem:[#allocation2 + $0x2c0] sm:$0xff]
    %v182 = vld [vmem:[#allocation2 + $0x2c8] sm:$0xff]
    %v183 = vld [vmem:[#allocation2 + $0x2d0] sm:$0xff]
    %v184 = vld [vmem:[#allocation2 + $0x2d8] sm:$0xff]
    %v185 = vld [vmem:[#allocation2 + $0x2e0] sm:$0xff]
    %v186 = vld [vmem:[#allocation2 + $0x2e8] sm:$0xff]
    %v187 = vld [vmem:[#allocation2 + $0x2f0] sm:$0xff]
    %v188 = vld [vmem:[#allocation2 + $0x2f8] sm:$0xff]
    %v189 = vld [vmem:[#allocation2 + $0x300] sm:$0xff]
    %v190 = vld [vmem:[#allocation2 + $0x308] sm:$0xff]
    %v191 = vld [vmem:[%s2] sm:$0x3]
    %v193 = vlaneseq
    %v194 = vshrl.u32 %v193, 7
    %v195 = vsub.s32 0, %v194
    %v196 = vrot.slane %v191, %v195
    %v197 = vlaneseq
    %v198 = vshrl.u32 %v197, 7
    %v199 = vsub.s32 1, %v198
    %v200 = vrot.slane %v191, %v199
    %v207 = vcombine.low %v89, %v90
    %v208 = vcombine.high %v89, %v90
    %v209 = vcombine.low %v91, %v92
    %v210 = vcombine.high %v91, %v92
    %v212 = vunpack.c.l.s4 1966171168
    %v213 = vunpack.c.0.s8 %v212
    %v214 = vlaneseq
    %v215 = vshrl.u32 %v214, 7
    %v216 = vsub.s32 %v213, %v215
    %v217 = vrot.slane %v207, %v216
    %v219 = vunpack.c.l.s4 1966171168
    %v220 = vunpack.c.0.s8 %v219
    %v221 = vlaneseq
    %v222 = vshrl.u32 %v221, 7
    %v223 = vsub.s32 %v220, %v222
    %v224 = vrot.slane %v208, %v223
    %v226 = vunpack.c.l.s4 1966171168
    %v227 = vunpack.c.0.s8 %v226
    %v228 = vlaneseq
    %v229 = vshrl.u32 %v228, 7
    %v230 = vsub.s32 %v227, %v229
    %v231 = vrot.slane %v209, %v230
    %v233 = vunpack.c.l.s4 1966171168
    %v234 = vunpack.c.0.s8 %v233
    %v235 = vlaneseq
    %v236 = vshrl.u32 %v235, 7
    %v237 = vsub.s32 %v234, %v236
    %v238 = vrot.slane %v210, %v237
    %v239 = vcombine.low %v217, %v231
    %v240 = vcombine.high %v217, %v231
    %v241 = vcombine.low %v224, %v238
    %v242 = vcombine.high %v224, %v238
    %v244 = vunpack.c.l.s4 1966171168
    %v245 = vunpack.c.0.s8 %v244
    %v246 = vlaneseq
    %v247 = vshrl.u32 %v246, 7
    %v248 = vsub.s32 %v245, %v247
    %v249 = vrot.slane %v239, %v248
    %v251 = vunpack.c.l.s4 1966171168
    %v252 = vunpack.c.0.s8 %v251
    %v253 = vlaneseq
    %v254 = vshrl.u32 %v253, 7
    %v255 = vsub.s32 %v252, %v254
    %v256 = vrot.slane %v241, %v255
    %v258 = vunpack.c.l.s4 1966171168
    %v259 = vunpack.c.0.s8 %v258
    %v260 = vlaneseq
    %v261 = vshrl.u32 %v260, 7
    %v262 = vsub.s32 %v259, %v261
    %v263 = vrot.slane %v240, %v262
    %v265 = vunpack.c.l.s4 1966171168
    %v266 = vunpack.c.0.s8 %v265
    %v267 = vlaneseq
    %v268 = vshrl.u32 %v267, 7
    %v269 = vsub.s32 %v266, %v268
    %v270 = vrot.slane %v242, %v269
    %v271 = vcombine.high %v249, %v249
    %v272 = vcombine.high %v256, %v256
    %v273 = vcombine.high %v263, %v263
    %v378 = vunpack.c.l.b16 %v93
    %v379 = vunpack.c.h.b16 %v93
    %v380 = vunpack.c.l.b16 %v94
    %v381 = vunpack.c.h.b16 %v94
    %v382 = vunpack.c.l.b16 %v95
    %v383 = vunpack.c.h.b16 %v95
    %v384 = vunpack.c.l.b16 %v96
    %v385 = vunpack.c.h.b16 %v96
    %v386 = vunpack.c.l.b16 %v97
    %v387 = vunpack.c.h.b16 %v97
    %v388 = vunpack.c.l.b16 %v98
    %v389 = vunpack.c.h.b16 %v98
    %v390 = vunpack.c.l.b16 %v99
    %v391 = vunpack.c.h.b16 %v99
    %v392 = vunpack.c.l.b16 %v100
    %v393 = vunpack.c.h.b16 %v100
    %v394 = vunpack.c.l.b16 %v101
    %v395 = vunpack.c.h.b16 %v101
    %v396 = vunpack.c.l.b16 %v102
    %v397 = vunpack.c.h.b16 %v102
    %v398 = vunpack.c.l.b16 %v103
    %v399 = vunpack.c.h.b16 %v103
    %v400 = vunpack.c.l.b16 %v104
    %v401 = vunpack.c.h.b16 %v104
    %v402 = vunpack.c.l.b16 %v105
    %v403 = vunpack.c.h.b16 %v105
    %v404 = vunpack.c.l.b16 %v106
    %v405 = vunpack.c.h.b16 %v106
    %v406 = vunpack.c.l.b16 %v107
    %v407 = vunpack.c.h.b16 %v107
    %v408 = vunpack.c.l.b16 %v108
    %v409 = vunpack.c.h.b16 %v108
    %v410 = vunpack.c.l.b16 %v109
    %v411 = vunpack.c.h.b16 %v109
    %v412 = vunpack.c.l.b16 %v110
    %v413 = vunpack.c.h.b16 %v110
    %v414 = vunpack.c.l.b16 %v111
    %v415 = vunpack.c.h.b16 %v111
    %v416 = vunpack.c.l.b16 %v112
    %v417 = vunpack.c.h.b16 %v112
    %v418 = vunpack.c.l.b16 %v113
    %v419 = vunpack.c.h.b16 %v113
    %v420 = vunpack.c.l.b16 %v114
    %v421 = vunpack.c.h.b16 %v114
    %v422 = vunpack.c.l.b16 %v115
    %v423 = vunpack.c.h.b16 %v115
    %v424 = vunpack.c.l.b16 %v116
    %v425 = vunpack.c.h.b16 %v116
    %v426 = vunpack.c.l.b16 %v117
    %v427 = vunpack.c.h.b16 %v117
    %v428 = vunpack.c.l.b16 %v118
    %v429 = vunpack.c.h.b16 %v118
    %v430 = vunpack.c.l.b16 %v119
    %v431 = vunpack.c.h.b16 %v119
    %v432 = vunpack.c.l.b16 %v120
    %v433 = vunpack.c.h.b16 %v120
    %v434 = vunpack.c.l.b16 %v121
    %v435 = vunpack.c.h.b16 %v121
    %v436 = vunpack.c.l.b16 %v122
    %v437 = vunpack.c.h.b16 %v122
    %v438 = vunpack.c.l.b16 %v123
    %v439 = vunpack.c.h.b16 %v123
    %v440 = vunpack.c.l.b16 %v124
    %v441 = vunpack.c.h.b16 %v124
    %v442 = vunpack.c.l.b16 %v125
    %v443 = vunpack.c.h.b16 %v125
    %v444 = vunpack.c.l.b16 %v126
    %v445 = vunpack.c.h.b16 %v126
    %v446 = vunpack.c.l.b16 %v127
    %v447 = vunpack.c.h.b16 %v127
    %v448 = vunpack.c.l.b16 %v128
    %v449 = vunpack.c.h.b16 %v128
    %v450 = vunpack.c.l.b16 %v129
    %v451 = vunpack.c.h.b16 %v129
    %v452 = vunpack.c.l.b16 %v130
    %v453 = vunpack.c.h.b16 %v130
    %v454 = vunpack.c.l.b16 %v131
    %v455 = vunpack.c.h.b16 %v131
    %v456 = vunpack.c.l.b16 %v132
    %v457 = vunpack.c.h.b16 %v132
    %v458 = vunpack.c.l.b16 %v133
    %v459 = vunpack.c.h.b16 %v133
    %v460 = vunpack.c.l.b16 %v134
    %v461 = vunpack.c.h.b16 %v134
    %v462 = vunpack.c.l.b16 %v135
    %v463 = vunpack.c.h.b16 %v135
    %v464 = vunpack.c.l.b16 %v136
    %v465 = vunpack.c.h.b16 %v136
    %v466 = vunpack.c.l.b16 %v137
    %v467 = vunpack.c.h.b16 %v137
    %v468 = vunpack.c.l.b16 %v138
    %v469 = vunpack.c.h.b16 %v138
    %v470 = vunpack.c.l.b16 %v139
    %v471 = vunpack.c.h.b16 %v139
    %v472 = vunpack.c.l.b16 %v140
    %v473 = vunpack.c.h.b16 %v140
    %v474 = vunpack.c.l.b16 %v141
    %v475 = vunpack.c.h.b16 %v141
    %v476 = vunpack.c.l.b16 %v142
    %v477 = vunpack.c.h.b16 %v142
    %v478 = vunpack.c.l.b16 %v143
    %v479 = vunpack.c.h.b16 %v143
    %v480 = vunpack.c.l.b16 %v144
    %v481 = vunpack.c.h.b16 %v144
    %v482 = vunpack.c.l.b16 %v145
    %v483 = vunpack.c.h.b16 %v145
    %v484 = vunpack.c.l.b16 %v146
    %v485 = vunpack.c.h.b16 %v146
    %v486 = vunpack.c.l.b16 %v147
    %v487 = vunpack.c.h.b16 %v147
    %v488 = vunpack.c.l.b16 %v148
    %v489 = vunpack.c.h.b16 %v148
    %v490 = vunpack.c.l.b16 %v149
    %v491 = vunpack.c.h.b16 %v149
    %v492 = vunpack.c.l.b16 %v150
    %v493 = vunpack.c.h.b16 %v150
    %v494 = vunpack.c.l.b16 %v151
    %v495 = vunpack.c.h.b16 %v151
    %v496 = vunpack.c.l.b16 %v152
    %v497 = vunpack.c.h.b16 %v152
    %v498 = vunpack.c.l.b16 %v153
    %v499 = vunpack.c.h.b16 %v153
    %v500 = vunpack.c.l.b16 %v154
    %v501 = vunpack.c.h.b16 %v154
    %v502 = vunpack.c.l.b16 %v155
    %v503 = vunpack.c.h.b16 %v155
    %v504 = vunpack.c.l.b16 %v156
    %v505 = vunpack.c.h.b16 %v156
    %v506 = vunpack.c.l.b16 %v157
    %v507 = vunpack.c.h.b16 %v157
    %v508 = vunpack.c.l.b16 %v158
    %v509 = vunpack.c.h.b16 %v158
    %v510 = vunpack.c.l.b16 %v159
    %v511 = vunpack.c.h.b16 %v159
    %v512 = vunpack.c.l.b16 %v160
    %v513 = vunpack.c.h.b16 %v160
    %v514 = vunpack.c.l.b16 %v161
    %v515 = vunpack.c.h.b16 %v161
    %v516 = vunpack.c.l.b16 %v162
    %v517 = vunpack.c.h.b16 %v162
    %v518 = vunpack.c.l.b16 %v163
    %v519 = vunpack.c.h.b16 %v163
    %v520 = vunpack.c.l.b16 %v164
    %v521 = vunpack.c.h.b16 %v164
    %v522 = vunpack.c.l.b16 %v165
    %v523 = vunpack.c.h.b16 %v165
    %v524 = vunpack.c.l.b16 %v166
    %v525 = vunpack.c.h.b16 %v166
    %v526 = vunpack.c.l.b16 %v167
    %v527 = vunpack.c.h.b16 %v167
    %v528 = vunpack.c.l.b16 %v168
    %v529 = vunpack.c.h.b16 %v168
    %v530 = vunpack.c.l.b16 %v169
    %v531 = vunpack.c.h.b16 %v169
    %v532 = vunpack.c.l.b16 %v170
    %v533 = vunpack.c.h.b16 %v170
    %v534 = vunpack.c.l.b16 %v171
    %v535 = vunpack.c.h.b16 %v171
    %v536 = vunpack.c.l.b16 %v172
    %v537 = vunpack.c.h.b16 %v172
    %v538 = vunpack.c.l.b16 %v173
    %v539 = vunpack.c.h.b16 %v173
    %v540 = vunpack.c.l.b16 %v174
    %v541 = vunpack.c.h.b16 %v174
    %v542 = vunpack.c.l.b16 %v175
    %v543 = vunpack.c.h.b16 %v175
    %v544 = vunpack.c.l.b16 %v176
    %v545 = vunpack.c.h.b16 %v176
    %v546 = vunpack.c.l.b16 %v177
    %v547 = vunpack.c.h.b16 %v177
    %v548 = vunpack.c.l.b16 %v178
    %v549 = vunpack.c.h.b16 %v178
    %v550 = vunpack.c.l.b16 %v179
    %v551 = vunpack.c.h.b16 %v179
    %v552 = vunpack.c.l.b16 %v180
    %v553 = vunpack.c.h.b16 %v180
    %v554 = vunpack.c.l.b16 %v181
    %v555 = vunpack.c.h.b16 %v181
    %v556 = vunpack.c.l.b16 %v182
    %v557 = vunpack.c.h.b16 %v182
    %v558 = vunpack.c.l.b16 %v183
    %v559 = vunpack.c.h.b16 %v183
    %v560 = vunpack.c.l.b16 %v184
    %v561 = vunpack.c.h.b16 %v184
    %v562 = vunpack.c.l.b16 %v185
    %v563 = vunpack.c.h.b16 %v185
    %v564 = vunpack.c.l.b16 %v186
    %v565 = vunpack.c.h.b16 %v186
    %v566 = vunpack.c.l.b16 %v187
    %v567 = vunpack.c.h.b16 %v187
    %v568 = vunpack.c.l.b16 %v188
    %v569 = vunpack.c.h.b16 %v188
    %v570 = vunpack.c.l.b16 %v189
    %v571 = vunpack.c.h.b16 %v189
    %v572 = vunpack.c.l.b16 %v190
    %v573 = vunpack.c.h.b16 %v190
    %v574 = vpack.c.b16 %v380, %v378
    %v575 = vpack.c.b16 %v381, %v379
    %v576 = vpack.c.b16 %v384, %v382
    %v577 = vpack.c.b16 %v385, %v383
    %v578 = vpack.c.b16 %v388, %v386
    %v579 = vpack.c.b16 %v389, %v387
    %v580 = vpack.c.b16 %v392, %v390
    %v581 = vpack.c.b16 %v393, %v391
    %v582 = vpack.c.b16 %v396, %v394
    %v583 = vpack.c.b16 %v397, %v395
    %v584 = vpack.c.b16 %v400, %v398
    %v585 = vpack.c.b16 %v401, %v399
    %v586 = vpack.c.b16 %v404, %v402
    %v587 = vpack.c.b16 %v405, %v403
    %v588 = vpack.c.b16 %v408, %v406
    %v589 = vpack.c.b16 %v409, %v407
    %v590 = vpack.c.b16 %v412, %v410
    %v591 = vpack.c.b16 %v413, %v411
    %v592 = vpack.c.b16 %v416, %v414
    %v593 = vpack.c.b16 %v417, %v415
    %v594 = vpack.c.b16 %v420, %v418
    %v595 = vpack.c.b16 %v421, %v419
    %v596 = vpack.c.b16 %v424, %v422
    %v597 = vpack.c.b16 %v425, %v423
    %v598 = vpack.c.b16 %v428, %v426
    %v599 = vpack.c.b16 %v429, %v427
    %v600 = vpack.c.b16 %v432, %v430
    %v601 = vpack.c.b16 %v433, %v431
    %v602 = vpack.c.b16 %v436, %v434
    %v603 = vpack.c.b16 %v437, %v435
    %v604 = vpack.c.b16 %v440, %v438
    %v605 = vpack.c.b16 %v441, %v439
    %v606 = vpack.c.b16 %v444, %v442
    %v607 = vpack.c.b16 %v445, %v443
    %v608 = vpack.c.b16 %v448, %v446
    %v609 = vpack.c.b16 %v449, %v447
    %v610 = vpack.c.b16 %v452, %v450
    %v611 = vpack.c.b16 %v453, %v451
    %v612 = vpack.c.b16 %v456, %v454
    %v613 = vpack.c.b16 %v457, %v455
    %v614 = vpack.c.b16 %v460, %v458
    %v615 = vpack.c.b16 %v461, %v459
    %v616 = vpack.c.b16 %v464, %v462
    %v617 = vpack.c.b16 %v465, %v463
    %v618 = vpack.c.b16 %v468, %v466
    %v619 = vpack.c.b16 %v469, %v467
    %v620 = vpack.c.b16 %v472, %v470
    %v621 = vpack.c.b16 %v473, %v471
    %v622 = vpack.c.b16 %v476, %v474
    %v623 = vpack.c.b16 %v477, %v475
    %v624 = vpack.c.b16 %v480, %v478
    %v625 = vpack.c.b16 %v481, %v479
    %v626 = vpack.c.b16 %v484, %v482
    %v627 = vpack.c.b16 %v485, %v483
    %v628 = vpack.c.b16 %v488, %v486
    %v629 = vpack.c.b16 %v489, %v487
    %v630 = vpack.c.b16 %v492, %v490
    %v631 = vpack.c.b16 %v493, %v491
    %v632 = vpack.c.b16 %v496, %v494
    %v633 = vpack.c.b16 %v497, %v495
    %v634 = vpack.c.b16 %v500, %v498
    %v635 = vpack.c.b16 %v501, %v499
    %v636 = vpack.c.b16 %v504, %v502
    %v637 = vpack.c.b16 %v505, %v503
    %v638 = vpack.c.b16 %v508, %v506
    %v639 = vpack.c.b16 %v509, %v507
    %v640 = vpack.c.b16 %v512, %v510
    %v641 = vpack.c.b16 %v513, %v511
    %v642 = vpack.c.b16 %v516, %v514
    %v643 = vpack.c.b16 %v517, %v515
    %v644 = vpack.c.b16 %v520, %v518
    %v645 = vpack.c.b16 %v521, %v519
    %v646 = vpack.c.b16 %v524, %v522
    %v647 = vpack.c.b16 %v525, %v523
    %v648 = vpack.c.b16 %v528, %v526
    %v649 = vpack.c.b16 %v529, %v527
    %v650 = vpack.c.b16 %v532, %v530
    %v651 = vpack.c.b16 %v533, %v531
    %v652 = vpack.c.b16 %v536, %v534
    %v653 = vpack.c.b16 %v537, %v535
    %v654 = vpack.c.b16 %v540, %v538
    %v655 = vpack.c.b16 %v541, %v539
    %v656 = vpack.c.b16 %v544, %v542
    %v657 = vpack.c.b16 %v545, %v543
    %v658 = vpack.c.b16 %v548, %v546
    %v659 = vpack.c.b16 %v549, %v547
    %v660 = vpack.c.b16 %v552, %v550
    %v661 = vpack.c.b16 %v553, %v551
    %v662 = vpack.c.b16 %v556, %v554
    %v663 = vpack.c.b16 %v557, %v555
    %v664 = vpack.c.b16 %v560, %v558
    %v665 = vpack.c.b16 %v561, %v559
    %v666 = vpack.c.b16 %v564, %v562
    %v667 = vpack.c.b16 %v565, %v563
    %v668 = vpack.c.b16 %v568, %v566
    %v669 = vpack.c.b16 %v569, %v567
    %v670 = vpack.c.b16 %v572, %v570
    %v671 = vpack.c.b16 %v573, %v571
    %vm770 = vcmask 130048
    %v772 = vsel %vm770, %v272, 0
    %774 = vmatprep.subr.bf16.mxu0 %v575
    %775 = vmatpush1.bf16.msra.mxu0 %v574
    %776 = vmatprep.subr.bf16.mxu0 %v577
    %777 = vmatpush1.bf16.msra.mxu0 %v576
    %778 = vmatprep.subr.bf16.mxu0 %v579
    %779 = vmatpush1.bf16.msra.mxu0 %v578
    %780 = vmatprep.subr.bf16.mxu0 %v581
    %781 = vmatpush1.bf16.msra.mxu0 %v580
    %782 = vmatprep.subr.bf16.mxu0 %v583
    %783 = vmatpush1.bf16.msra.mxu0 %v582
    %784 = vmatprep.subr.bf16.mxu0 %v585
    %785 = vmatpush1.bf16.msra.mxu0 %v584
    %786 = vmatprep.subr.bf16.mxu0 %v587
    %787 = vmatpush1.bf16.msra.mxu0 %v586
    %788 = vmatprep.subr.bf16.mxu0 %v589
    %789 = vmatpush1.bf16.msra.mxu0 %v588
    %790 = vmatprep.subr.bf16.mxu0 %v591
    %791 = vmatpush1.bf16.msra.mxu0 %v590
    %792 = vmatprep.subr.bf16.mxu0 %v593
    %793 = vmatpush1.bf16.msra.mxu0 %v592
    %794 = vmatprep.subr.bf16.mxu0 %v595
    %795 = vmatpush1.bf16.msra.mxu0 %v594
    %796 = vmatprep.subr.bf16.mxu0 %v597
    %797 = vmatpush1.bf16.msra.mxu0 %v596
    %798 = vmatprep.subr.bf16.mxu0 %v599
    %799 = vmatpush1.bf16.msra.mxu0 %v598
    %800 = vmatprep.subr.bf16.mxu0 %v601
    %801 = vmatpush1.bf16.msra.mxu0 %v600
    %802 = vmatprep.subr.bf16.mxu0 %v603
    %803 = vmatpush1.bf16.msra.mxu0 %v602
    %804 = vmatprep.subr.bf16.mxu0 %v605
    %805 = vmatpush1.bf16.msra.mxu0 %v604
    %806 = vmatprep.mubr.bf16.mxu0 %v263
    %807 = vmatmul.mubr.bf16.gmra.mrb[0].mxu0 %v249
    %v808 = vpop.f32.mrb[0].mxu0
    %v809 = vadd.f32 %v196, %v808
    %v810 = vpop.f32.mrb[0].mxu0
    %v811 = vadd.f32 %v200, %v810
    %v812 = vpop.f32.mrb[0].mxu0
    %v813 = vpop.f32.mrb[0].mxu0
    %814 = vdwg.mxu0
    %815 = vmatprep.subr.bf16.mxu0 %v607
    %816 = vmatpush1.bf16.msra.mxu0 %v606
    %817 = vmatprep.subr.bf16.mxu0 %v609
    %818 = vmatpush1.bf16.msra.mxu0 %v608
    %819 = vmatprep.subr.bf16.mxu0 %v611
    %820 = vmatpush1.bf16.msra.mxu0 %v610
    %821 = vmatprep.subr.bf16.mxu0 %v613
    %822 = vmatpush1.bf16.msra.mxu0 %v612
    %823 = vmatprep.subr.bf16.mxu0 %v615
    %824 = vmatpush1.bf16.msra.mxu0 %v614
    %825 = vmatprep.subr.bf16.mxu0 %v617
    %826 = vmatpush1.bf16.msra.mxu0 %v616
    %827 = vmatprep.subr.bf16.mxu0 %v619
    %828 = vmatpush1.bf16.msra.mxu0 %v618
    %829 = vmatprep.subr.bf16.mxu0 %v621
    %830 = vmatpush1.bf16.msra.mxu0 %v620
    %831 = vmatprep.subr.bf16.mxu0 %v623
    %832 = vmatpush1.bf16.msra.mxu0 %v622
    %833 = vmatprep.subr.bf16.mxu0 %v625
    %834 = vmatpush1.bf16.msra.mxu0 %v624
    %835 = vmatprep.subr.bf16.mxu0 %v627
    %836 = vmatpush1.bf16.msra.mxu0 %v626
    %837 = vmatprep.subr.bf16.mxu0 %v629
    %838 = vmatpush1.bf16.msra.mxu0 %v628
    %839 = vmatprep.subr.bf16.mxu0 %v631
    %840 = vmatpush1.bf16.msra.mxu0 %v630
    %841 = vmatprep.subr.bf16.mxu0 %v633
    %842 = vmatpush1.bf16.msra.mxu0 %v632
    %843 = vmatprep.subr.bf16.mxu0 %v635
    %844 = vmatpush1.bf16.msra.mxu0 %v634
    %845 = vmatprep.subr.bf16.mxu0 %v637
    %846 = vmatpush1.bf16.msra.mxu0 %v636
    %847 = vmatprep.mubr.bf16.mxu0 %v273
    %848 = vmatmul.mubr.bf16.gmra.mrb[0].mxu0 %v271
    %v849 = vpop.f32.mrb[0].mxu0
    %v850 = vadd.f32 %v809, %v849
    %v851 = vpop.f32.mrb[0].mxu0
    %v852 = vadd.f32 %v811, %v851
    %v853 = vpop.f32.mrb[0].mxu0
    %v854 = vpop.f32.mrb[0].mxu0
    %855 = vdwg.mxu0
    %856 = vmatprep.subr.bf16.mxu0 %v639
    %857 = vmatpush1.bf16.msra.mxu0 %v638
    %858 = vmatprep.subr.bf16.mxu0 %v641
    %859 = vmatpush1.bf16.msra.mxu0 %v640
    %860 = vmatprep.subr.bf16.mxu0 %v643
    %861 = vmatpush1.bf16.msra.mxu0 %v642
    %862 = vmatprep.subr.bf16.mxu0 %v645
    %863 = vmatpush1.bf16.msra.mxu0 %v644
    %864 = vmatprep.subr.bf16.mxu0 %v647
    %865 = vmatpush1.bf16.msra.mxu0 %v646
    %866 = vmatprep.subr.bf16.mxu0 %v649
    %867 = vmatpush1.bf16.msra.mxu0 %v648
    %868 = vmatprep.subr.bf16.mxu0 %v651
    %869 = vmatpush1.bf16.msra.mxu0 %v650
    %870 = vmatprep.subr.bf16.mxu0 %v653
    %871 = vmatpush1.bf16.msra.mxu0 %v652
    %872 = vmatprep.subr.bf16.mxu0 %v655
    %873 = vmatpush1.bf16.msra.mxu0 %v654
    %874 = vmatprep.subr.bf16.mxu0 %v657
    %875 = vmatpush1.bf16.msra.mxu0 %v656
    %876 = vmatprep.subr.bf16.mxu0 %v659
    %877 = vmatpush1.bf16.msra.mxu0 %v658
    %878 = vmatprep.subr.bf16.mxu0 %v661
    %879 = vmatpush1.bf16.msra.mxu0 %v660
    %880 = vmatprep.subr.bf16.mxu0 %v663
    %881 = vmatpush1.bf16.msra.mxu0 %v662
    %882 = vmatprep.subr.bf16.mxu0 %v665
    %883 = vmatpush1.bf16.msra.mxu0 %v664
    %884 = vmatprep.subr.bf16.mxu0 %v667
    %885 = vmatpush1.bf16.msra.mxu0 %v666
    %886 = vmatprep.subr.bf16.mxu0 %v669
    %887 = vmatpush1.bf16.msra.mxu0 %v668
    %888 = vmatprep.mubr.bf16.mxu0 %v270
    %889 = vmatmul.mubr.bf16.gmra.mrb[0].mxu0 %v256
    %v890 = vpop.f32.mrb[0].mxu0
    %v891 = vadd.f32 %v850, %v890
    %v892 = vpop.f32.mrb[0].mxu0
    %v893 = vadd.f32 %v852, %v892
    %v894 = vpop.f32.mrb[0].mxu0
    %v895 = vpop.f32.mrb[0].mxu0
    %896 = vdwg.mxu0
    %897 = vmatprep.subr.bf16.mxu0 %v671
    %898 = vmatpush1.bf16.msra.mxu0 %v670
    %899 = vmatprep.subr.bf16.mxu0 0
    %900 = vmatpush1.bf16.msra.mxu0 0
    %901 = vmatprep.subr.bf16.mxu0 0
    %902 = vmatpush1.bf16.msra.mxu0 0
    %903 = vmatprep.subr.bf16.mxu0 0
    %904 = vmatpush1.bf16.msra.mxu0 0
    %905 = vmatprep.subr.bf16.mxu0 0
    %906 = vmatpush1.bf16.msra.mxu0 0
    %907 = vmatprep.subr.bf16.mxu0 0
    %908 = vmatpush1.bf16.msra.mxu0 0
    %909 = vmatprep.subr.bf16.mxu0 0
    %910 = vmatpush1.bf16.msra.mxu0 0
    %911 = vmatprep.subr.bf16.mxu0 0
    %912 = vmatpush1.bf16.msra.mxu0 0
    %913 = vmatprep.subr.bf16.mxu0 0
    %914 = vmatpush1.bf16.msra.mxu0 0
    %915 = vmatprep.subr.bf16.mxu0 0
    %916 = vmatpush1.bf16.msra.mxu0 0
    %917 = vmatprep.subr.bf16.mxu0 0
    %918 = vmatpush1.bf16.msra.mxu0 0
    %919 = vmatprep.subr.bf16.mxu0 0
    %920 = vmatpush1.bf16.msra.mxu0 0
    %921 = vmatprep.subr.bf16.mxu0 0
    %922 = vmatpush1.bf16.msra.mxu0 0
    %923 = vmatprep.subr.bf16.mxu0 0
    %924 = vmatpush1.bf16.msra.mxu0 0
    %925 = vmatprep.subr.bf16.mxu0 0
    %926 = vmatpush1.bf16.msra.mxu0 0
    %927 = vmatprep.subr.bf16.mxu0 0
    %928 = vmatpush1.bf16.msra.mxu0 0
    %929 = vmatprep.mubr.bf16.mxu0 0
    %930 = vmatmul.mubr.bf16.gmra.mrb[0].mxu0 %v772
    %v931 = vpop.f32.mrb[0].mxu0
    %v932 = vadd.f32 %v891, %v931
    %v933 = vpop.f32.mrb[0].mxu0
    %v934 = vadd.f32 %v893, %v933
    %v935 = vpop.f32.mrb[0].mxu0
    %v936 = vpop.f32.mrb[0].mxu0
    %937 = vdwg.mxu0
    %v938 = vmax.f32 %v932, 0.0
    %v939 = vmax.f32 %v934, 0.0
    %v940 = vpack.c.bf16 %v938, %v938
    %v941 = vpack.c.bf16 %v939, %v939
    %v942 = vld [vmem:[#allocation5] sm:$0xf]
    %v943 = vld [vmem:[#allocation5 + $0x4] sm:$0xf]
    %v944 = vld [vmem:[#allocation5 + $0x8] sm:$0xf]
    %v945 = vld [vmem:[#allocation5 + $0xc] sm:$0xf]
    %v946 = vld [vmem:[#allocation5 + $0x10] sm:$0xf]
    %v947 = vld [vmem:[#allocation5 + $0x14] sm:$0xf]
    %v948 = vld [vmem:[#allocation5 + $0x18] sm:$0xf]
    %v949 = vld [vmem:[#allocation5 + $0x1c] sm:$0xf]
    %v950 = vld [vmem:[#allocation5 + $0x20] sm:$0xf]
    %v951 = vld [vmem:[#allocation5 + $0x24] sm:$0xf]
    %v952 = vld [vmem:[#allocation5 + $0x28] sm:$0xf]
    %v953 = vld [vmem:[#allocation5 + $0x2c] sm:$0xf]
    %v954 = vld [vmem:[#allocation5 + $0x30] sm:$0xf]
    %v955 = vld [vmem:[#allocation5 + $0x34] sm:$0xf]
    %v956 = vld [vmem:[#allocation5 + $0x38] sm:$0xf]
    %v957 = vld [vmem:[#allocation5 + $0x3c] sm:$0xf]
    %v958 = vld [vmem:[#allocation5 + $0x40] sm:$0xf]
    %v959 = vld [vmem:[#allocation5 + $0x44] sm:$0xf]
    %v960 = vld [vmem:[#allocation5 + $0x48] sm:$0xf]
    %v961 = vld [vmem:[#allocation5 + $0x4c] sm:$0xf]
    %v962 = vld [vmem:[#allocation5 + $0x50] sm:$0xf]
    %v963 = vld [vmem:[#allocation5 + $0x54] sm:$0xf]
    %v964 = vld [vmem:[#allocation5 + $0x58] sm:$0xf]
    %v965 = vld [vmem:[#allocation5 + $0x5c] sm:$0xf]
    %v966 = vld [vmem:[#allocation5 + $0x60] sm:$0xf]
    %v967 = vld [vmem:[#allocation5 + $0x64] sm:$0xf]
    %v968 = vld [vmem:[#allocation5 + $0x68] sm:$0xf]
    %v969 = vld [vmem:[#allocation5 + $0x6c] sm:$0xf]
    %v970 = vld [vmem:[#allocation5 + $0x70] sm:$0xf]
    %v971 = vld [vmem:[#allocation5 + $0x74] sm:$0xf]
    %v972 = vld [vmem:[#allocation5 + $0x78] sm:$0xf]
    %v973 = vld [vmem:[#allocation5 + $0x7c] sm:$0xf]
    %v974 = vld [vmem:[%s4] sm:$0x1]
    %v976 = vlaneseq
    %v977 = vshrl.u32 %v976, 7
    %v978 = vsub.s32 0, %v977
    %v979 = vrot.slane %v974, %v978
    %v1013 = vunpack.c.l.b16 %v942
    %v1014 = vunpack.c.l.b16 %v943
    %v1015 = vunpack.c.l.b16 %v944
    %v1016 = vunpack.c.l.b16 %v945
    %v1017 = vunpack.c.l.b16 %v946
    %v1018 = vunpack.c.l.b16 %v947
    %v1019 = vunpack.c.l.b16 %v948
    %v1020 = vunpack.c.l.b16 %v949
    %v1021 = vunpack.c.l.b16 %v950
    %v1022 = vunpack.c.l.b16 %v951
    %v1023 = vunpack.c.l.b16 %v952
    %v1024 = vunpack.c.l.b16 %v953
    %v1025 = vunpack.c.l.b16 %v954
    %v1026 = vunpack.c.l.b16 %v955
    %v1027 = vunpack.c.l.b16 %v956
    %v1028 = vunpack.c.l.b16 %v957
    %v1029 = vunpack.c.l.b16 %v958
    %v1030 = vunpack.c.l.b16 %v959
    %v1031 = vunpack.c.l.b16 %v960
    %v1032 = vunpack.c.l.b16 %v961
    %v1033 = vunpack.c.l.b16 %v962
    %v1034 = vunpack.c.l.b16 %v963
    %v1035 = vunpack.c.l.b16 %v964
    %v1036 = vunpack.c.l.b16 %v965
    %v1037 = vunpack.c.l.b16 %v966
    %v1038 = vunpack.c.l.b16 %v967
    %v1039 = vunpack.c.l.b16 %v968
    %v1040 = vunpack.c.l.b16 %v969
    %v1041 = vunpack.c.l.b16 %v970
    %v1042 = vunpack.c.l.b16 %v971
    %v1043 = vunpack.c.l.b16 %v972
    %v1044 = vunpack.c.l.b16 %v973
    %v1045 = vpack.c.b16 %v1014, %v1013
    %v1046 = vpack.c.b16 %v1016, %v1015
    %v1047 = vpack.c.b16 %v1018, %v1017
    %v1048 = vpack.c.b16 %v1020, %v1019
    %v1049 = vpack.c.b16 %v1022, %v1021
    %v1050 = vpack.c.b16 %v1024, %v1023
    %v1051 = vpack.c.b16 %v1026, %v1025
    %v1052 = vpack.c.b16 %v1028, %v1027
    %v1053 = vpack.c.b16 %v1030, %v1029
    %v1054 = vpack.c.b16 %v1032, %v1031
    %v1055 = vpack.c.b16 %v1034, %v1033
    %v1056 = vpack.c.b16 %v1036, %v1035
    %v1057 = vpack.c.b16 %v1038, %v1037
    %v1058 = vpack.c.b16 %v1040, %v1039
    %v1059 = vpack.c.b16 %v1042, %v1041
    %v1060 = vpack.c.b16 %v1044, %v1043
    %1077 = vmatprep.subr.bf16.mxu0 0
    %1078 = vmatpush1.bf16.msra.mxu0 %v1045
    %1079 = vmatprep.subr.bf16.mxu0 0
    %1080 = vmatpush1.bf16.msra.mxu0 %v1046
    %1081 = vmatprep.subr.bf16.mxu0 0
    %1082 = vmatpush1.bf16.msra.mxu0 %v1047
    %1083 = vmatprep.subr.bf16.mxu0 0
    %1084 = vmatpush1.bf16.msra.mxu0 %v1048
    %1085 = vmatprep.subr.bf16.mxu0 0
    %1086 = vmatpush1.bf16.msra.mxu0 %v1049
    %1087 = vmatprep.subr.bf16.mxu0 0
    %1088 = vmatpush1.bf16.msra.mxu0 %v1050
    %1089 = vmatprep.subr.bf16.mxu0 0
    %1090 = vmatpush1.bf16.msra.mxu0 %v1051
    %1091 = vmatprep.subr.bf16.mxu0 0
    %1092 = vmatpush1.bf16.msra.mxu0 %v1052
    %1093 = vmatprep.subr.bf16.mxu0 0
    %1094 = vmatpush1.bf16.msra.mxu0 %v1053
    %1095 = vmatprep.subr.bf16.mxu0 0
    %1096 = vmatpush1.bf16.msra.mxu0 %v1054
    %1097 = vmatprep.subr.bf16.mxu0 0
    %1098 = vmatpush1.bf16.msra.mxu0 %v1055
    %1099 = vmatprep.subr.bf16.mxu0 0
    %1100 = vmatpush1.bf16.msra.mxu0 %v1056
    %1101 = vmatprep.subr.bf16.mxu0 0
    %1102 = vmatpush1.bf16.msra.mxu0 %v1057
    %1103 = vmatprep.subr.bf16.mxu0 0
    %1104 = vmatpush1.bf16.msra.mxu0 %v1058
    %1105 = vmatprep.subr.bf16.mxu0 0
    %1106 = vmatpush1.bf16.msra.mxu0 %v1059
    %1107 = vmatprep.subr.bf16.mxu0 0
    %1108 = vmatpush1.bf16.msra.mxu0 %v1060
    %1109 = vmatprep.mubr.bf16.mxu0 %v941
    %1110 = vmatmul.mubr.bf16.gmra.mrb[0].mxu0 %v940
    %v1111 = vpop.f32.mrb[0].mxu0
    %v1112 = vadd.f32 %v979, %v1111
    %v1113 = vpop.f32.mrb[0].mxu0
    %v1114 = vpop.f32.mrb[0].mxu0
    %v1115 = vpop.f32.mrb[0].mxu0
    %1116 = vdwg.mxu0
    %v1117 = vmax.f32 %v1112, 0.0
    %v1118 = vpack.c.bf16 %v1117, %v1117
    %v1119 = vld [vmem:[#allocation7] sm:$0xf]
    %v1120 = vld [vmem:[#allocation7 + $0x4] sm:$0xf]
    %v1121 = vld [vmem:[#allocation7 + $0x8] sm:$0xf]
    %v1122 = vld [vmem:[#allocation7 + $0xc] sm:$0xf]
    %v1123 = vld [vmem:[#allocation7 + $0x10] sm:$0xf]
    %v1124 = vld [vmem:[#allocation7 + $0x14] sm:$0xf]
    %v1125 = vld [vmem:[#allocation7 + $0x18] sm:$0xf]
    %v1126 = vld [vmem:[#allocation7 + $0x1c] sm:$0xf]
    %v1127 = vld [vmem:[#allocation7 + $0x20] sm:$0xf]
    %v1128 = vld [vmem:[#allocation7 + $0x24] sm:$0xf]
    %v1129 = vld [vmem:[#allocation7 + $0x28] sm:$0xf]
    %v1130 = vld [vmem:[#allocation7 + $0x2c] sm:$0xf]
    %v1131 = vld [vmem:[#allocation7 + $0x30] sm:$0xf]
    %v1132 = vld [vmem:[#allocation7 + $0x34] sm:$0xf]
    %v1133 = vld [vmem:[#allocation7 + $0x38] sm:$0xf]
    %v1134 = vld [vmem:[#allocation7 + $0x3c] sm:$0xf]
    %v1135 = vld [vmem:[%s6] sm:$0x1]
    %v1137 = vlaneseq
    %v1138 = vshrl.u32 %v1137, 7
    %v1139 = vsub.s32 0, %v1138
    %v1140 = vrot.slane %v1135, %v1139
    %v1158 = vunpack.c.l.b16 %v1119
    %v1159 = vunpack.c.l.b16 %v1120
    %v1160 = vunpack.c.l.b16 %v1121
    %v1161 = vunpack.c.l.b16 %v1122
    %v1162 = vunpack.c.l.b16 %v1123
    %v1163 = vunpack.c.l.b16 %v1124
    %v1164 = vunpack.c.l.b16 %v1125
    %v1165 = vunpack.c.l.b16 %v1126
    %v1166 = vunpack.c.l.b16 %v1127
    %v1167 = vunpack.c.l.b16 %v1128
    %v1168 = vunpack.c.l.b16 %v1129
    %v1169 = vunpack.c.l.b16 %v1130
    %v1170 = vunpack.c.l.b16 %v1131
    %v1171 = vunpack.c.l.b16 %v1132
    %v1172 = vunpack.c.l.b16 %v1133
    %v1173 = vunpack.c.l.b16 %v1134
    %v1174 = vpack.c.b16 %v1159, %v1158
    %v1175 = vpack.c.b16 %v1161, %v1160
    %v1176 = vpack.c.b16 %v1163, %v1162
    %v1177 = vpack.c.b16 %v1165, %v1164
    %v1178 = vpack.c.b16 %v1167, %v1166
    %v1179 = vpack.c.b16 %v1169, %v1168
    %v1180 = vpack.c.b16 %v1171, %v1170
    %v1181 = vpack.c.b16 %v1173, %v1172
    %1190 = vmatprep.subr.bf16.mxu0 0
    %1191 = vmatpush1.bf16.msra.mxu0 %v1174
    %1192 = vmatprep.subr.bf16.mxu0 0
    %1193 = vmatpush1.bf16.msra.mxu0 %v1175
    %1194 = vmatprep.subr.bf16.mxu0 0
    %1195 = vmatpush1.bf16.msra.mxu0 %v1176
    %1196 = vmatprep.subr.bf16.mxu0 0
    %1197 = vmatpush1.bf16.msra.mxu0 %v1177
    %1198 = vmatprep.subr.bf16.mxu0 0
    %1199 = vmatpush1.bf16.msra.mxu0 %v1178
    %1200 = vmatprep.subr.bf16.mxu0 0
    %1201 = vmatpush1.bf16.msra.mxu0 %v1179
    %1202 = vmatprep.subr.bf16.mxu0 0
    %1203 = vmatpush1.bf16.msra.mxu0 %v1180
    %1204 = vmatprep.subr.bf16.mxu0 0
    %1205 = vmatpush1.bf16.msra.mxu0 %v1181
    %1206 = vmatprep.subr.bf16.mxu0 0
    %1207 = vmatpush1.bf16.msra.mxu0 0
    %1208 = vmatprep.subr.bf16.mxu0 0
    %1209 = vmatpush1.bf16.msra.mxu0 0
    %1210 = vmatprep.subr.bf16.mxu0 0
    %1211 = vmatpush1.bf16.msra.mxu0 0
    %1212 = vmatprep.subr.bf16.mxu0 0
    %1213 = vmatpush1.bf16.msra.mxu0 0
    %1214 = vmatprep.subr.bf16.mxu0 0
    %1215 = vmatpush1.bf16.msra.mxu0 0
    %1216 = vmatprep.subr.bf16.mxu0 0
    %1217 = vmatpush1.bf16.msra.mxu0 0
    %1218 = vmatprep.subr.bf16.mxu0 0
    %1219 = vmatpush1.bf16.msra.mxu0 0
    %1220 = vmatprep.subr.bf16.mxu0 0
    %1221 = vmatpush1.bf16.msra.mxu0 0
    %1222 = vmatprep.mubr.bf16.mxu0 0
    %1223 = vmatmul.mubr.bf16.gmra.mrb[0].mxu0 %v1118
    %v1224 = vpop.f32.mrb[0].mxu0
    %v1225 = vadd.f32 %v1140, %v1224
    %v1226 = vpop.f32.mrb[0].mxu0
    %v1227 = vpop.f32.mrb[0].mxu0
    %v1228 = vpop.f32.mrb[0].mxu0
    %1229 = vdwg.mxu0
    %v1230 = vmax.f32 %v1225, 0.0
    %v1231 = vpack.c.bf16 %v1230, %v1230
    %v1232 = vld [vmem:[#allocation8] sm:$0xf]
    %v1233 = vld [vmem:[#allocation8 + $0x4] sm:$0xf]
    %v1234 = vld [vmem:[#allocation8 + $0x8] sm:$0xf]
    %v1235 = vld [vmem:[#allocation8 + $0xc] sm:$0xf]
    %v1236 = vld [vmem:[#allocation8 + $0x10] sm:$0xf]
    %v1237 = vld [vmem:[#allocation8 + $0x14] sm:$0xf]
    %v1238 = vld [vmem:[#allocation8 + $0x18] sm:$0xf]
    %v1239 = vld [vmem:[#allocation8 + $0x1c] sm:$0xf]
    %v1240 = vld [vmem:[#allocation8 + $0x20] sm:$0xf]
    %v1241 = vld [vmem:[#allocation8 + $0x24] sm:$0xf]
    %v1242 = vld [vmem:[#allocation8 + $0x28] sm:$0xf]
    %v1243 = vld [vmem:[#allocation8 + $0x2c] sm:$0xf]
    %v1244 = vld [vmem:[#allocation8 + $0x30] sm:$0xf]
    %v1245 = vld [vmem:[#allocation8 + $0x34] sm:$0xf]
    %v1246 = vld [vmem:[#allocation8 + $0x38] sm:$0xf]
    %v1247 = vld [vmem:[#allocation8 + $0x3c] sm:$0xf]
    %v1248 = vld [vmem:[%s8] sm:$0x1]
    %v1250 = vlaneseq
    %v1251 = vshrl.u32 %v1250, 7
    %v1252 = vsub.s32 0, %v1251
    %v1253 = vrot.slane %v1248, %v1252
    %v1271 = vunpack.c.l.b16 %v1232
    %v1272 = vunpack.c.l.b16 %v1233
    %v1273 = vunpack.c.l.b16 %v1234
    %v1274 = vunpack.c.l.b16 %v1235
    %v1275 = vunpack.c.l.b16 %v1236
    %v1276 = vunpack.c.l.b16 %v1237
    %v1277 = vunpack.c.l.b16 %v1238
    %v1278 = vunpack.c.l.b16 %v1239
    %v1279 = vunpack.c.l.b16 %v1240
    %v1280 = vunpack.c.l.b16 %v1241
    %v1281 = vunpack.c.l.b16 %v1242
    %v1282 = vunpack.c.l.b16 %v1243
    %v1283 = vunpack.c.l.b16 %v1244
    %v1284 = vunpack.c.l.b16 %v1245
    %v1285 = vunpack.c.l.b16 %v1246
    %v1286 = vunpack.c.l.b16 %v1247
    %v1287 = vpack.c.b16 %v1272, %v1271
    %v1288 = vpack.c.b16 %v1274, %v1273
    %v1289 = vpack.c.b16 %v1276, %v1275
    %v1290 = vpack.c.b16 %v1278, %v1277
    %v1291 = vpack.c.b16 %v1280, %v1279
    %v1292 = vpack.c.b16 %v1282, %v1281
    %v1293 = vpack.c.b16 %v1284, %v1283
    %v1294 = vpack.c.b16 %v1286, %v1285
    %1303 = vmatprep.subr.bf16.mxu0 0
    %1304 = vmatpush1.bf16.msra.mxu0 %v1287
    %1305 = vmatprep.subr.bf16.mxu0 0
    %1306 = vmatpush1.bf16.msra.mxu0 %v1288
    %1307 = vmatprep.subr.bf16.mxu0 0
    %1308 = vmatpush1.bf16.msra.mxu0 %v1289
    %1309 = vmatprep.subr.bf16.mxu0 0
    %1310 = vmatpush1.bf16.msra.mxu0 %v1290
    %1311 = vmatprep.subr.bf16.mxu0 0
    %1312 = vmatpush1.bf16.msra.mxu0 %v1291
    %1313 = vmatprep.subr.bf16.mxu0 0
    %1314 = vmatpush1.bf16.msra.mxu0 %v1292
    %1315 = vmatprep.subr.bf16.mxu0 0
    %1316 = vmatpush1.bf16.msra.mxu0 %v1293
    %1317 = vmatprep.subr.bf16.mxu0 0
    %1318 = vmatpush1.bf16.msra.mxu0 %v1294
    %1319 = vmatprep.subr.bf16.mxu0 0
    %1320 = vmatpush1.bf16.msra.mxu0 0
    %1321 = vmatprep.subr.bf16.mxu0 0
    %1322 = vmatpush1.bf16.msra.mxu0 0
    %1323 = vmatprep.subr.bf16.mxu0 0
    %1324 = vmatpush1.bf16.msra.mxu0 0
    %1325 = vmatprep.subr.bf16.mxu0 0
    %1326 = vmatpush1.bf16.msra.mxu0 0
    %1327 = vmatprep.subr.bf16.mxu0 0
    %1328 = vmatpush1.bf16.msra.mxu0 0
    %1329 = vmatprep.subr.bf16.mxu0 0
    %1330 = vmatpush1.bf16.msra.mxu0 0
    %1331 = vmatprep.subr.bf16.mxu0 0
    %1332 = vmatpush1.bf16.msra.mxu0 0
    %1333 = vmatprep.subr.bf16.mxu0 0
    %1334 = vmatpush1.bf16.msra.mxu0 0
    %1335 = vmatprep.mubr.bf16.mxu0 0
    %1336 = vmatmul.mubr.bf16.gmra.mrb[0].mxu0 %v1231
    %v1337 = vpop.f32.mrb[0].mxu0
    %v1338 = vadd.f32 %v1253, %v1337
    %v1339 = vpop.f32.mrb[0].mxu0
    %v1340 = vpop.f32.mrb[0].mxu0
    %v1341 = vpop.f32.mrb[0].mxu0
    %1342 = vdwg.mxu0
    %1343 = vst [vmem:[#allocation10] sm:$0xff] %v1338
    // Predicated region
    $region54: #{fnn_forward.1} parent=1 // pred_check
      _
    $region55: #{fnn_forward.1} parent=1 // pred_check_branch
      %1345 = sbr.rel (0) target = $region57
    $region56: #{fnn_forward.1} parent=1 // pred_region
      %s1347 = ssub.s32 128, 32
      %1348 = vsyncadd [#allocation4], %s1347
      %s1349 = sshll.u32 [#allocation10], 4
      %s1350 = int_to_ptr.vmem [resolvable:$true] %s1349
      %1355 = dma.vmem_to_hbm [thread:$0]  %s1350, 32, %s9, [#allocation4], 32, 32, 2
    $region57: #{fnn_forward.1} parent=1 // pred_fallthru
      _
    // Predicated region
    $region58: #{fnn_forward.1} parent=1 // pred_check
      _
    $region59: #{fnn_forward.1} parent=1 // pred_check_branch
      %1357 = sbr.rel (0) target = $region61
    $region60: #{fnn_forward.1} parent=1 // pred_region
      %1358 = dma.done [#allocation4], 128
    $region61: #{fnn_forward.1} parent=1 // pred_fallthru
      _
    %1359 = vsyncpa [#allocation3], 1
    %1360 = vsyncpa [#allocation6], 1
    %1361 = vsyncpa [#allocation9], 1
    %1362 = vsyncpa [#allocation4], 1

</llo_original>
